<compile_context>
chip_gen: v6e
topology: v6e:2x2x1
jax: 0.10.0
libtpu: 0.0.40
codegen_flags: <defaults>
</compile_context>

<pallas_src>
import math

import jax
import jax.numpy as jnp
from jax import lax
from jax.experimental import pallas as pl
from jax.experimental.pallas import tpu as pltpu


def _round_up(x, m):
    return ((x + m - 1) // m) * m


# ---------------------------------------------------------------------------
# Kernel: whole sequence in one grid step (grid = (1,)), fori_loop over time.
# ---------------------------------------------------------------------------
def _gru_seq_kernel(tok_ref,     # SMEM (T,) int32   scalar-prefetched token ids
                    emb_ref,     # VMEM (Vp, Hp)     embedding table (VMEM-resident)
                    w_ref,       # VMEM (2Hp, 4Hp)   fused [x|h] -> [r|z|i_n|h_n] weights
                    b_ref,       # VMEM (1, 4Hp) f32 fused bias
                    h0_ref,      # VMEM (1, Hp) f32  initial hidden
                    out_ref,     # VMEM (Tp, Hp) f32 all hidden states (single writeback)
                    h_scr,       # VMEM (1, Hp) f32  carried hidden state
                    xh_scr):     # VMEM (1, 2Hp)     [x | h] MXU operand buffer
    Hp = h0_ref.shape[-1]
    T = tok_ref.shape[0]
    cdt = w_ref.dtype

    h_scr[...] = h0_ref[...]

    def step(t, carry):
        tok = tok_ref[t]                               # SMEM scalar read
        x = emb_ref[pl.ds(tok, 1), :]                  # (1, Hp) in-VMEM row gather
        h = h_scr[...]                                 # (1, Hp) f32 carried state

        xh_scr[:, 0:Hp] = x.astype(cdt)
        xh_scr[:, Hp:2 * Hp] = h.astype(cdt)

        # Single fused MXU push per step, f32 accumulation:
        #   g = [ i_r+h_r | i_z+h_z | i_n | h_n ] + fused biases
        g = jnp.dot(xh_scr[...], w_ref[...],
                    preferred_element_type=jnp.float32) + b_ref[...]

        rz = jax.nn.sigmoid(g[:, 0:2 * Hp])            # r and z in one EUP pass
        r = rz[:, 0:Hp]
        z = rz[:, Hp:2 * Hp]
        n = jnp.tanh(g[:, 2 * Hp:3 * Hp] + r * g[:, 3 * Hp:4 * Hp])

        h_new = (1.0 - z) * n + z * h                  # pad lanes: 0.5*0 + 0.5*0 = 0
        h_scr[...] = h_new
        out_ref[pl.ds(t, 1), :] = h_new                # VMEM store; HBM writeback once
        return carry

    lax.fori_loop(0, T, step, 0)


# ---------------------------------------------------------------------------
# One-time parameter preparation (transpose / pad / fuse / dtype).
# ---------------------------------------------------------------------------
def prepare_params(params, compute_dtype=jnp.float32):
    emb = params["embedding"].astype(jnp.float32)
    w_ih = params["w_ih"].astype(jnp.float32)
    w_hh = params["w_hh"].astype(jnp.float32)
    b_ih = params["b_ih"].astype(jnp.float32)
    b_hh = params["b_hh"].astype(jnp.float32)

    V, H = emb.shape
    Hp = _round_up(max(H, 128), 128)      # lane-dense hidden dim
    Vp = _round_up(max(V, 8), 8)          # sublane-dense vocab dim

    emb_p = jnp.zeros((Vp, Hp), jnp.float32).at[:V, :H].set(emb)

    # Fused weight: rows [0,Hp) are the x operand, rows [Hp,2Hp) are h.
    #   cols [0,Hp)      : Wih_r^T over Whh_r^T  -> i_r + h_r
    #   cols [Hp,2Hp)    : Wih_z^T over Whh_z^T  -> i_z + h_z
    #   cols [2Hp,3Hp)   : Wih_n^T over 0        -> i_n
    #   cols [3Hp,4Hp)   : 0       over Whh_n^T  -> h_n
    W = jnp.zeros((2 * Hp, 4 * Hp), jnp.float32)
    for g in range(2):                     # r, z gates
        W = W.at[0:H, g * Hp:g * Hp + H].set(w_ih[g * H:(g + 1) * H, :].T)
        W = W.at[Hp:Hp + H, g * Hp:g * Hp + H].set(w_hh[g * H:(g + 1) * H, :].T)
    W = W.at[0:H, 2 * Hp:2 * Hp + H].set(w_ih[2 * H:3 * H, :].T)
    W = W.at[Hp:Hp + H, 3 * Hp:3 * Hp + H].set(w_hh[2 * H:3 * H, :].T)

    # Fused bias (f32).  Pad lanes MUST stay exactly zero (see header guard).
    b = jnp.zeros((1, 4 * Hp), jnp.float32)
    b = b.at[0, 0 * Hp:0 * Hp + H].set(b_ih[0:H] + b_hh[0:H])
    b = b.at[0, 1 * Hp:1 * Hp + H].set(b_ih[H:2 * H] + b_hh[H:2 * H])
    b = b.at[0, 2 * Hp:2 * Hp + H].set(b_ih[2 * H:3 * H])
    b = b.at[0, 3 * Hp:3 * Hp + H].set(b_hh[2 * H:3 * H])

    return {
        "V": V, "H": H, "Hp": Hp, "Vp": Vp,
        "compute_dtype": compute_dtype,
        "emb": emb_p.astype(compute_dtype),
        "w": W.astype(compute_dtype),
        "b": b,                            # biases stay f32
    }


# ---------------------------------------------------------------------------
# Wrappers
# ---------------------------------------------------------------------------
def gru_encode(tokens, hidden, prep):
    """Run T GRU encoder steps in a single pallas_call / single grid step.

    tokens : int array, shape (T,)
    hidden : (1, 1, H) f32 initial hidden
    returns (outputs (T, 1, H) f32, final hidden (1, 1, H) f32)
    """
    V, H, Hp, Vp = prep["V"], prep["H"], prep["Hp"], prep["Vp"]
    cdt = prep["compute_dtype"]
    T = int(tokens.shape[0])
    Tp = _round_up(max(T, 8), 8)           # sublane-dense output rows

    tok = jnp.clip(tokens.reshape(T).astype(jnp.int32), 0, V - 1)
    h0 = jnp.zeros((1, Hp), jnp.float32).at[:, :H].set(
        hidden.reshape(1, H).astype(jnp.float32))

    itemsize = jnp.dtype(cdt).itemsize
    est_vmem = (2 * (Vp * Hp + 2 * Hp * 4 * Hp) * itemsize   # double-buffered inputs
                + 2 * Tp * Hp * 4 + 4 * Hp * 4 * 2 + 4 * Hp * 4)
    vmem_limit = None
    if est_vmem > 24 << 20:                # raise scoped VMEM only if actually needed
        vmem_limit = min(est_vmem + (8 << 20), 60 << 20)

    outs = pl.pallas_call(
        _gru_seq_kernel,
        out_shape=jax.ShapeDtypeStruct((Tp, Hp), jnp.float32),
        grid_spec=pltpu.PrefetchScalarGridSpec(
            num_scalar_prefetch=1,         # token ids -> SMEM, read inside the loop
            grid=(1,),
            in_specs=[
                # Everything is DMA'd once (constant index maps) and stays
                # VMEM-resident for all T in-kernel steps.
                pl.BlockSpec((Vp, Hp), lambda i, tok: (0, 0)),          # embedding
                pl.BlockSpec((2 * Hp, 4 * Hp), lambda i, tok: (0, 0)),  # fused W
                pl.BlockSpec((1, 4 * Hp), lambda i, tok: (0, 0)),       # fused bias
                pl.BlockSpec((1, Hp), lambda i, tok: (0, 0)),           # h0
            ],
            # Full-extent output block: one HBM writeback for the whole sequence.
            out_specs=pl.BlockSpec((Tp, Hp), lambda i, tok: (0, 0)),
            scratch_shapes=[
                pltpu.VMEM((1, Hp), jnp.float32),   # carried hidden state
                pltpu.VMEM((1, 2 * Hp), cdt),       # [x | h] MXU operand
            ],
        ),
        compiler_params=pltpu.CompilerParams(
            dimension_semantics=("arbitrary",),
            vmem_limit_bytes=vmem_limit),
    )(tok, prep["emb"], prep["w"], prep["b"], h0)

    outs = outs[:T, :H]                               # drop sublane/lane padding
    outputs = outs.reshape(T, 1, H)
    hidden_out = outs[T - 1].reshape(1, 1, H)
    return outputs, hidden_out


def encoder_rnn_forward(token, hidden, prep):
    """Pallas equivalent of EncoderRNN.forward (single-token step).

    NOTE: do not call this in a host-side loop over a whole sequence -- use
    gru_encode(tokens, ...) so weights are transferred once per sequence.
    """
    outputs, hidden_out = gru_encode(token.reshape(1), hidden, prep)
    return outputs.reshape(1, 1, -1), hidden_out


# ---------------------------------------------------------------------------
# Pure-JAX reference (mirrors torch.nn.Embedding + torch.nn.GRU)
# ---------------------------------------------------------------------------
def _reference_encode(tokens, hidden, params):
    emb = params["embedding"]
    w_ih, w_hh = params["w_ih"], params["w_hh"]
    b_ih, b_hh = params["b_ih"], params["b_hh"]
    H = hidden.shape[-1]

    def step(h, tok):
        x = emb[tok]
        gi = x @ w_ih.T + b_ih
        gh = h @ w_hh.T + b_hh
        i_r, i_z, i_n = gi[:H], gi[H:2 * H], gi[2 * H:]
        h_r, h_z, h_n = gh[:H], gh[H:2 * H], gh[2 * H:]
        r = jax.nn.sigmoid(i_r + h_r)
        z = jax.nn.sigmoid(i_z + h_z)
        n = jnp.tanh(i_n + r * h_n)       # h_n already contains b_hn
        h_new = (1.0 - z) * n + z * h
        return h_new, h_new

    h_final, outs = lax.scan(step, hidden.reshape(H),
                             tokens.reshape(-1).astype(jnp.int32))
    return outs.reshape(-1, 1, H), h_final.reshape(1, 1, H)


def init_params(key, input_size, hidden_size):
    k_emb, k_wih, k_whh, k_bih, k_bhh = jax.random.split(key, 5)
    bound = 1.0 / math.sqrt(hidden_size)
    return {
        # torch.nn.Embedding default init: N(0, 1)
        "embedding": jax.random.normal(
            k_emb, (input_size, hidden_size), dtype=jnp.float32),
        # torch.nn.GRU default init: U(-1/sqrt(H), 1/sqrt(H))
        "w_ih": jax.random.uniform(
            k_wih, (3 * hidden_size, hidden_size),
            minval=-bound, maxval=bound, dtype=jnp.float32),
        "w_hh": jax.random.uniform(
            k_whh, (3 * hidden_size, hidden_size),
            minval=-bound, maxval=bound, dtype=jnp.float32),
        "b_ih": jax.random.uniform(
            k_bih, (3 * hidden_size,),
            minval=-bound, maxval=bound, dtype=jnp.float32),
        "b_hh": jax.random.uniform(
            k_bhh, (3 * hidden_size,),
            minval=-bound, maxval=bound, dtype=jnp.float32),
    }


if __name__ == "__main__":
    input_size = 16      # vocab size
    hidden_size = 32
    seq_len = 8

    key = jax.random.PRNGKey(0)
    k_params, k_tok = jax.random.split(key)

    params = init_params(k_params, input_size, hidden_size)
    tokens = jax.random.randint(k_tok, (seq_len,), 0, input_size, dtype=jnp.int32)
    hidden0 = jnp.zeros((1, 1, hidden_size), dtype=jnp.float32)   # initHidden()

    # ---- module-exact single-step forward (f32 weights) --------------------
    prep_f32 = prepare_params(params, compute_dtype=jnp.float32)
    out1, hid1 = encoder_rnn_forward(tokens[:1], hidden0, prep_f32)
    out1 = jax.block_until_ready(out1)
    hid1 = jax.block_until_ready(hid1)
    ref_out1, ref_hid1 = _reference_encode(tokens[:1], hidden0, params)
    assert out1.shape == (1, 1, hidden_size)
    assert hid1.shape == (1, 1, hidden_size)
    assert jnp.allclose(out1, ref_out1.reshape(1, 1, hidden_size),
                        atol=1e-4, rtol=1e-4)
    assert jnp.allclose(hid1, ref_hid1, atol=1e-4, rtol=1e-4)

    # ---- full encoder sequence: one launch, one grid step, in-kernel loop ---
    outs, hid = gru_encode(tokens, hidden0, prep_f32)
    outs = jax.block_until_ready(outs)
    hid = jax.block_until_ready(hid)
    ref_outs, ref_hid = _reference_encode(tokens, hidden0, params)
    assert outs.shape == (seq_len, 1, hidden_size)
    assert jnp.allclose(outs, ref_outs, atol=1e-4, rtol=1e-4)
    assert jnp.allclose(hid, ref_hid, atol=1e-4, rtol=1e-4)

    # ---- optional bf16 MXU-operand storage (f32 accumulation / gate math) ---
    # Minor knob: weights/table are DMA'd once, so this mostly halves their
    # VMEM footprint.  Carried h is f32 but re-quantized per step, so error
    # grows with T; revisit tolerance for long sequences.
    prep_bf16 = prepare_params(params, compute_dtype=jnp.bfloat16)
    outs_bf, hid_bf = gru_encode(tokens, hidden0, prep_bf16)
    outs_bf = jax.block_until_ready(outs_bf)
    assert jnp.allclose(outs_bf, ref_outs, atol=5e-2, rtol=5e-2)
    assert jnp.allclose(hid_bf, ref_hid, atol=5e-2, rtol=5e-2)

    print("KERNEL_OK")
</pallas_src>

<mosaic_0001>
module attributes {stable_mosaic.version = 11 : i64} {
  func.func @_gru_seq_kernel(%arg0: i32, %arg1: memref<1xi32, #tpu.memory_space<smem>>, %arg2: memref<16x128xf32, #tpu.memory_space<vmem>>, %arg3: memref<256x512xf32, #tpu.memory_space<vmem>>, %arg4: memref<1x512xf32, #tpu.memory_space<vmem>>, %arg5: memref<1x128xf32, #tpu.memory_space<vmem>>, %arg6: memref<8x128xf32, #tpu.memory_space<vmem>>, %arg7: memref<1x128xf32, #tpu.memory_space<vmem>>, %arg8: memref<1x256xf32, #tpu.memory_space<vmem>>) attributes {dimension_semantics = [#tpu.dimension_semantics<arbitrary>], iteration_bounds = array<i64: 1>, scalar_prefetch = 1 : i64, scratch_operands = 2 : i64, tpu.core_type = #tpu.core_type<tc>, window_params = [{pipeline_mode = #tpu.pipeline_mode<synchronous>, transform_indices = @transform_0, window_bounds = array<i64: 16, 128>}, {pipeline_mode = #tpu.pipeline_mode<synchronous>, transform_indices = @transform_1, window_bounds = array<i64: 256, 512>}, {pipeline_mode = #tpu.pipeline_mode<synchronous>, transform_indices = @transform_2, window_bounds = array<i64: 1, 512>}, {pipeline_mode = #tpu.pipeline_mode<synchronous>, transform_indices = @transform_3, window_bounds = array<i64: 1, 128>}, {pipeline_mode = #tpu.pipeline_mode<synchronous>, transform_indices = @transform_4, window_bounds = array<i64: 8, 128>}]} {
    %c0 = arith.constant 0 : index
    %c0_0 = arith.constant 0 : index
    %0 = vector.load %arg5[%c0, %c0_0] : memref<1x128xf32, #tpu.memory_space<vmem>>, vector<1x128xf32>
    %c0_1 = arith.constant 0 : index
    %c0_2 = arith.constant 0 : index
    %1 = vector.load %arg7[%c0_1, %c0_2] : memref<1x128xf32, #tpu.memory_space<vmem>>, vector<1x128xf32>
    tpu.vector_store %arg7[%c0_1, %c0_2], %0 {strides = array<i32>} : memref<1x128xf32, #tpu.memory_space<vmem>>, vector<1x128xf32>,
    %c0_i32 = arith.constant 0 : i32
    %2 = arith.index_cast %c0_i32 : i32 to index
    %3 = memref.load %arg1[%2] : memref<1xi32, #tpu.memory_space<smem>>
    %4 = arith.index_cast %3 : i32 to index
    %c0_3 = arith.constant 0 : index
    %5 = vector.load %arg2[%4, %c0_3] : memref<16x128xf32, #tpu.memory_space<vmem>>, vector<1x128xf32>
    %c0_4 = arith.constant 0 : index
    %c0_5 = arith.constant 0 : index
    %6 = vector.load %arg7[%c0_4, %c0_5] : memref<1x128xf32, #tpu.memory_space<vmem>>, vector<1x128xf32>
    %c0_6 = arith.constant 0 : index
    %c0_7 = arith.constant 0 : index
    %7 = vector.load %arg8[%c0_6, %c0_7] : memref<1x256xf32, #tpu.memory_space<vmem>>, vector<1x128xf32>
    tpu.vector_store %arg8[%c0_6, %c0_7], %5 {strides = array<i32>} : memref<1x256xf32, #tpu.memory_space<vmem>>, vector<1x128xf32>,
    %c0_8 = arith.constant 0 : index
    %c128 = arith.constant 128 : index
    %8 = vector.load %arg8[%c0_8, %c128] : memref<1x256xf32, #tpu.memory_space<vmem>>, vector<1x128xf32>
    tpu.vector_store %arg8[%c0_8, %c128], %6 {strides = array<i32>} : memref<1x256xf32, #tpu.memory_space<vmem>>, vector<1x128xf32>,
    %c0_9 = arith.constant 0 : index
    %c0_10 = arith.constant 0 : index
    %9 = vector.load %arg8[%c0_9, %c0_10] : memref<1x256xf32, #tpu.memory_space<vmem>>, vector<1x256xf32>
    %c0_11 = arith.constant 0 : index
    %c0_12 = arith.constant 0 : index
    %10 = vector.load %arg3[%c0_11, %c0_12] : memref<256x512xf32, #tpu.memory_space<vmem>>, vector<256x512xf32>
    %cst = arith.constant dense<0.000000e+00> : vector<1x512xf32>
    %11 = tpu.matmul %9, %10, %cst {dimension_numbers = #tpu.dot_dimension_numbers<[1], [0], [0], [1], [0, 0, 1, 1], [], []>} : vector<1x256xf32>, vector<256x512xf32>, vector<1x512xf32> -> vector<1x512xf32>
    %c0_13 = arith.constant 0 : index
    %c0_14 = arith.constant 0 : index
    %12 = vector.load %arg4[%c0_13, %c0_14] : memref<1x512xf32, #tpu.memory_space<vmem>>, vector<1x512xf32>
    %13 = arith.addf %11, %12 : vector<1x512xf32>
    %14 = vector.extract_strided_slice %13 {offsets = [0, 0], sizes = [1, 256], strides = [1, 1]} : vector<1x512xf32> to vector<1x256xf32>
    %15 = arith.negf %14 : vector<1x256xf32>
    %16 = math.exp %15 : vector<1x256xf32>
    %cst_15 = arith.constant 1.000000e+00 : f32
    %17 = vector.broadcast %cst_15 : f32 to vector<1x256xf32>
    %18 = arith.addf %17, %16 : vector<1x256xf32>
    %19 = arith.divf %17, %18 : vector<1x256xf32>
    %20 = vector.extract_strided_slice %19 {offsets = [0, 0], sizes = [1, 128], strides = [1, 1]} : vector<1x256xf32> to vector<1x128xf32>
    %21 = vector.extract_strided_slice %19 {offsets = [0, 128], sizes = [1, 128], strides = [1, 1]} : vector<1x256xf32> to vector<1x128xf32>
    %22 = vector.extract_strided_slice %13 {offsets = [0, 256], sizes = [1, 128], strides = [1, 1]} : vector<1x512xf32> to vector<1x128xf32>
    %23 = vector.extract_strided_slice %13 {offsets = [0, 384], sizes = [1, 128], strides = [1, 1]} : vector<1x512xf32> to vector<1x128xf32>
    %24 = arith.mulf %20, %23 : vector<1x128xf32>
    %25 = arith.addf %22, %24 : vector<1x128xf32>
    %26 = math.tanh %25 : vector<1x128xf32>
    %cst_16 = arith.constant 1.000000e+00 : f32
    %27 = vector.broadcast %cst_16 : f32 to vector<1x128xf32>
    %28 = arith.subf %27, %21 : vector<1x128xf32>
    %29 = arith.mulf %28, %26 : vector<1x128xf32>
    %30 = arith.mulf %21, %6 : vector<1x128xf32>
    %31 = arith.addf %29, %30 : vector<1x128xf32>
    %c0_17 = arith.constant 0 : index
    %c0_18 = arith.constant 0 : index
    %32 = vector.load %arg7[%c0_17, %c0_18] : memref<1x128xf32, #tpu.memory_space<vmem>>, vector<1x128xf32>
    tpu.vector_store %arg7[%c0_17, %c0_18], %31 {strides = array<i32>} : memref<1x128xf32, #tpu.memory_space<vmem>>, vector<1x128xf32>,
    %33 = arith.index_cast %c0_i32 : i32 to index
    %c0_19 = arith.constant 0 : index
    %34 = vector.load %arg6[%33, %c0_19] : memref<8x128xf32, #tpu.memory_space<vmem>>, vector<1x128xf32>
    tpu.vector_store %arg6[%33, %c0_19], %31 {strides = array<i32>} : memref<8x128xf32, #tpu.memory_space<vmem>>, vector<1x128xf32>,
    %c1_i32 = arith.constant 1 : i32
    return
  }
  func.func @transform_0(%arg0: i32, %arg1: memref<1xi32, #tpu.memory_space<smem>>) -> (i32, i32) {
    %c0_i32 = arith.constant 0 : i32
    %c0_i32_0 = arith.constant 0 : i32
    %c0_i32_1 = arith.constant 0 : i32
    return %c0_i32, %c0_i32_0 : i32, i32
  }
  func.func @transform_1(%arg0: i32, %arg1: memref<1xi32, #tpu.memory_space<smem>>) -> (i32, i32) {
    %c0_i32 = arith.constant 0 : i32
    %c0_i32_0 = arith.constant 0 : i32
    %c0_i32_1 = arith.constant 0 : i32
    return %c0_i32, %c0_i32_0 : i32, i32
  }
  func.func @transform_2(%arg0: i32, %arg1: memref<1xi32, #tpu.memory_space<smem>>) -> (i32, i32) {
    %c0_i32 = arith.constant 0 : i32
    %c0_i32_0 = arith.constant 0 : i32
    %c0_i32_1 = arith.constant 0 : i32
    return %c0_i32, %c0_i32_0 : i32, i32
  }
  func.func @transform_3(%arg0: i32, %arg1: memref<1xi32, #tpu.memory_space<smem>>) -> (i32, i32) {
    %c0_i32 = arith.constant 0 : i32
    %c0_i32_0 = arith.constant 0 : i32
    %c0_i32_1 = arith.constant 0 : i32
    return %c0_i32, %c0_i32_0 : i32, i32
  }
  func.func @transform_4(%arg0: i32, %arg1: memref<1xi32, #tpu.memory_space<smem>>) -> (i32, i32) {
    %c0_i32 = arith.constant 0 : i32
    %c0_i32_0 = arith.constant 0 : i32
    %c0_i32_1 = arith.constant 0 : i32
    return %c0_i32, %c0_i32_0 : i32, i32
  }
}

</mosaic_0001>

<llo_original>
// kernel: tpu_custom_call.1
$region0: #{tpu_custom_call.1}
  #allocation0 [shape = 'u32[]', space=smem, size = 0x4, offset = 0x4, fixed_abs, tag = 'smem constant byte address 0x4 - core index']
  #allocation1 [shape = 'u32[144,128]{1,0:T(1,128)}', space=vmem, size = 0x12000, scoped, tag = 'internal scratch']
  #allocation2 [shape = 'f32[1,128]{1,0:T(1,128)}', space=vmem, size = 0x200, scoped, tag = 'scratch operand']
  #allocation3 [shape = 'f32[1,256]{1,0:T(1,128)}', space=vmem, size = 0x400, scoped, tag = 'scratch operand']
  #allocation4 [shape = 's32[1]{0}', space=sflag, size = 0x4, scoped, tag = 'scoped memory for tpu_custom_call.1']
  #allocation5 [shape = 's32[1]{0:T(128)S(6)}', space=smem, size = 0x200, scoped, tag = 'prefetched SMEM operand 0']
  %s0 = inlined_call_operand.<no memory space> [shape: s32[1], index: 0, kind: input, shape index: {}]
  %s1 = inlined_call_operand.hbm [shape: f32[16,128], index: 1, kind: input, shape index: {}]
  %s2 = inlined_call_operand.hbm [shape: f32[256,512], index: 2, kind: input, shape index: {}]
  %s3 = inlined_call_operand.vmem [shape: f32[1,512], index: 3, kind: input, shape index: {}]
  %s4 = inlined_call_operand.vmem [shape: f32[1,128], index: 4, kind: input, shape index: {}]
  %s5 = inlined_call_operand.hbm [shape: f32[8,128], index: 5, kind: output, shape index: {}]
  %s6 = sld [smem:[#allocation0]]
  $region34: #{tpu_custom_call.1} parent=0
    _
  %s8 = ssub.s32 1, %s6
  %s9 = scalar_select 0, %s8, %s6
  %10 = sst [smem:[#allocation5]] %s0
  $region1: #{tpu_custom_call.1} parent=0
    #allocation6 [shape = 'u8[8192]{0}', space=vmem, size = 0x2000, scoped, tag = 'input window, operand 1, single buffered']
    #allocation7 [shape = 's32[1]{0}', space=sflag, size = 0x4, scoped, tag = 'scoped memory for tpu_custom_call.1']
    #allocation8 [shape = 's32[1]{0}', space=sflag, size = 0x4, scoped, tag = 'scoped memory for tpu_custom_call.1']
    #allocation9 [shape = 'u8[524288]{0}', space=vmem, size = 0x80000, scoped, tag = 'input window, operand 2, single buffered']
    #allocation10 [shape = 's32[1]{0}', space=sflag, size = 0x4, scoped, tag = 'scoped memory for tpu_custom_call.1']
    #allocation11 [shape = 'u8[4096]{0}', space=vmem, size = 0x1000, scoped, tag = 'output window, operand 0, single buffered']
    %11 = vsyncpa [#allocation7], 0
    %12 = vsyncpa [#allocation10], 0
    %13 = vsyncpa [#allocation8], 0
    // Predicated region
    $region2: #{tpu_custom_call.1} parent=1 // pred_check
      _
    $region3: #{tpu_custom_call.1} parent=1 // pred_check_branch
      %15 = sbr.rel (0) target = $region5
    $region4: #{tpu_custom_call.1} parent=1 // pred_region
      %s17 = ssub.s32 256, 256
      %18 = vsyncadd [#allocation7], %s17
      %s19 = sshll.u32 [#allocation6], 4
      %s20 = int_to_ptr.vmem [resolvable:$true] %s19
      %25 = dma.hbm_to_vmem [thread:$0]  %s1, 256, %s20, [#allocation7], 128, 128, 8
    $region5: #{tpu_custom_call.1} parent=1 // pred_fallthru
      _
    // Predicated region
    $region6: #{tpu_custom_call.1} parent=1 // pred_check
      _
    $region7: #{tpu_custom_call.1} parent=1 // pred_check_branch
      %27 = sbr.rel (0) target = $region9
    $region8: #{tpu_custom_call.1} parent=1 // pred_region
      %s29 = ssub.s32 16384, 16384
      %30 = vsyncadd [#allocation10], %s29
      %s31 = sshll.u32 [#allocation9], 4
      %s32 = int_to_ptr.vmem [resolvable:$true] %s31
      %37 = dma.hbm_to_vmem [thread:$0]  %s2, 16384, %s32, [#allocation10], 512, 512, 32
    $region9: #{tpu_custom_call.1} parent=1 // pred_fallthru
      _
    // Predicated region
    $region10: #{tpu_custom_call.1} parent=1 // pred_check
      _
    $region11: #{tpu_custom_call.1} parent=1 // pred_check_branch
      %39 = sbr.rel (0) target = $region13
    $region12: #{tpu_custom_call.1} parent=1 // pred_region
      _
    $region13: #{tpu_custom_call.1} parent=1 // pred_fallthru
      _
    // Predicated region
    $region14: #{tpu_custom_call.1} parent=1 // pred_check
      _
    $region15: #{tpu_custom_call.1} parent=1 // pred_check_branch
      %41 = sbr.rel (0) target = $region17
    $region16: #{tpu_custom_call.1} parent=1 // pred_region
      _
    $region17: #{tpu_custom_call.1} parent=1 // pred_fallthru
      _
    // Predicated region
    $region18: #{tpu_custom_call.1} parent=1 // pred_check
      _
    $region19: #{tpu_custom_call.1} parent=1 // pred_check_branch
      %43 = sbr.rel (0) target = $region21
    $region20: #{tpu_custom_call.1} parent=1 // pred_region
      %44 = dma.done [#allocation7], 256
    $region21: #{tpu_custom_call.1} parent=1 // pred_fallthru
      _
    // Predicated region
    $region22: #{tpu_custom_call.1} parent=1 // pred_check
      _
    $region23: #{tpu_custom_call.1} parent=1 // pred_check_branch
      %46 = sbr.rel (0) target = $region25
    $region24: #{tpu_custom_call.1} parent=1 // pred_region
      %47 = dma.done [#allocation10], 16384
    $region25: #{tpu_custom_call.1} parent=1 // pred_fallthru
      _
    %v48 = vld [vmem:[%s4] sm:$0x1]
    %49 = vst [vmem:[#allocation2] sm:$0x1] %v48
    %s50 = sld [smem:[#allocation5]]
    %s51 = scalar_lea.vmem [#allocation6], %s50
    %v52 = vld [vmem:[%s51] sm:$0x1]
    %v53 = vld [vmem:[#allocation2] sm:$0x1]
    %v54 = vlaneseq
    %vm55 = vcmp.ge.s32.totalorder %v54, 0
    %vm56 = vcmp.lt.s32.totalorder %v54, 128
    %vm57 = vmand %vm55, %vm56
    %58 = vst.msk [vmem:[#allocation3] sm:$0x1] %vm57, %v52
    %59 = vst.msk [vmem:[#allocation3 + $0x1] sm:$0x1] %vm57, %v53
    %v60 = vld [vmem:[#allocation3] sm:$0x3]
    %v61 = vld [vmem:[#allocation9] sm:$0xff]
    %v62 = vld [vmem:[#allocation9 + $0x8] sm:$0xff]
    %v63 = vld [vmem:[#allocation9 + $0x10] sm:$0xff]
    %v64 = vld [vmem:[#allocation9 + $0x18] sm:$0xff]
    %v65 = vld [vmem:[#allocation9 + $0x20] sm:$0xff]
    %v66 = vld [vmem:[#allocation9 + $0x28] sm:$0xff]
    %v67 = vld [vmem:[#allocation9 + $0x30] sm:$0xff]
    %v68 = vld [vmem:[#allocation9 + $0x38] sm:$0xff]
    %v69 = vld [vmem:[#allocation9 + $0x40] sm:$0xff]
    %v70 = vld [vmem:[#allocation9 + $0x48] sm:$0xff]
    %v71 = vld [vmem:[#allocation9 + $0x50] sm:$0xff]
    %v72 = vld [vmem:[#allocation9 + $0x58] sm:$0xff]
    %v73 = vld [vmem:[#allocation9 + $0x60] sm:$0xff]
    %v74 = vld [vmem:[#allocation9 + $0x68] sm:$0xff]
    %v75 = vld [vmem:[#allocation9 + $0x70] sm:$0xff]
    %v76 = vld [vmem:[#allocation9 + $0x78] sm:$0xff]
    %v77 = vld [vmem:[#allocation9 + $0x80] sm:$0xff]
    %v78 = vld [vmem:[#allocation9 + $0x88] sm:$0xff]
    %v79 = vld [vmem:[#allocation9 + $0x90] sm:$0xff]
    %v80 = vld [vmem:[#allocation9 + $0x98] sm:$0xff]
    %v81 = vld [vmem:[#allocation9 + $0xa0] sm:$0xff]
    %v82 = vld [vmem:[#allocation9 + $0xa8] sm:$0xff]
    %v83 = vld [vmem:[#allocation9 + $0xb0] sm:$0xff]
    %v84 = vld [vmem:[#allocation9 + $0xb8] sm:$0xff]
    %v85 = vld [vmem:[#allocation9 + $0xc0] sm:$0xff]
    %v86 = vld [vmem:[#allocation9 + $0xc8] sm:$0xff]
    %v87 = vld [vmem:[#allocation9 + $0xd0] sm:$0xff]
    %v88 = vld [vmem:[#allocation9 + $0xd8] sm:$0xff]
    %v89 = vld [vmem:[#allocation9 + $0xe0] sm:$0xff]
    %v90 = vld [vmem:[#allocation9 + $0xe8] sm:$0xff]
    %v91 = vld [vmem:[#allocation9 + $0xf0] sm:$0xff]
    %v92 = vld [vmem:[#allocation9 + $0xf8] sm:$0xff]
    %v93 = vld [vmem:[#allocation9 + $0x100] sm:$0xff]
    %v94 = vld [vmem:[#allocation9 + $0x108] sm:$0xff]
    %v95 = vld [vmem:[#allocation9 + $0x110] sm:$0xff]
    %v96 = vld [vmem:[#allocation9 + $0x118] sm:$0xff]
    %v97 = vld [vmem:[#allocation9 + $0x120] sm:$0xff]
    %v98 = vld [vmem:[#allocation9 + $0x128] sm:$0xff]
    %v99 = vld [vmem:[#allocation9 + $0x130] sm:$0xff]
    %v100 = vld [vmem:[#allocation9 + $0x138] sm:$0xff]
    %v101 = vld [vmem:[#allocation9 + $0x140] sm:$0xff]
    %v102 = vld [vmem:[#allocation9 + $0x148] sm:$0xff]
    %v103 = vld [vmem:[#allocation9 + $0x150] sm:$0xff]
    %v104 = vld [vmem:[#allocation9 + $0x158] sm:$0xff]
    %v105 = vld [vmem:[#allocation9 + $0x160] sm:$0xff]
    %v106 = vld [vmem:[#allocation9 + $0x168] sm:$0xff]
    %v107 = vld [vmem:[#allocation9 + $0x170] sm:$0xff]
    %v108 = vld [vmem:[#allocation9 + $0x178] sm:$0xff]
    %v109 = vld [vmem:[#allocation9 + $0x180] sm:$0xff]
    %v110 = vld [vmem:[#allocation9 + $0x188] sm:$0xff]
    %v111 = vld [vmem:[#allocation9 + $0x190] sm:$0xff]
    %v112 = vld [vmem:[#allocation9 + $0x198] sm:$0xff]
    %v113 = vld [vmem:[#allocation9 + $0x1a0] sm:$0xff]
    %v114 = vld [vmem:[#allocation9 + $0x1a8] sm:$0xff]
    %v115 = vld [vmem:[#allocation9 + $0x1b0] sm:$0xff]
    %v116 = vld [vmem:[#allocation9 + $0x1b8] sm:$0xff]
    %v117 = vld [vmem:[#allocation9 + $0x1c0] sm:$0xff]
    %v118 = vld [vmem:[#allocation9 + $0x1c8] sm:$0xff]
    %v119 = vld [vmem:[#allocation9 + $0x1d0] sm:$0xff]
    %v120 = vld [vmem:[#allocation9 + $0x1d8] sm:$0xff]
    %v121 = vld [vmem:[#allocation9 + $0x1e0] sm:$0xff]
    %v122 = vld [vmem:[#allocation9 + $0x1e8] sm:$0xff]
    %v123 = vld [vmem:[#allocation9 + $0x1f0] sm:$0xff]
    %v124 = vld [vmem:[#allocation9 + $0x1f8] sm:$0xff]
    %v125 = vld [vmem:[#allocation9 + $0x200] sm:$0xff]
    %v126 = vld [vmem:[#allocation9 + $0x208] sm:$0xff]
    %v127 = vld [vmem:[#allocation9 + $0x210] sm:$0xff]
    %v128 = vld [vmem:[#allocation9 + $0x218] sm:$0xff]
    %v129 = vld [vmem:[#allocation9 + $0x220] sm:$0xff]
    %v130 = vld [vmem:[#allocation9 + $0x228] sm:$0xff]
    %v131 = vld [vmem:[#allocation9 + $0x230] sm:$0xff]
    %v132 = vld [vmem:[#allocation9 + $0x238] sm:$0xff]
    %v133 = vld [vmem:[#allocation9 + $0x240] sm:$0xff]
    %v134 = vld [vmem:[#allocation9 + $0x248] sm:$0xff]
    %v135 = vld [vmem:[#allocation9 + $0x250] sm:$0xff]
    %v136 = vld [vmem:[#allocation9 + $0x258] sm:$0xff]
    %v137 = vld [vmem:[#allocation9 + $0x260] sm:$0xff]
    %v138 = vld [vmem:[#allocation9 + $0x268] sm:$0xff]
    %v139 = vld [vmem:[#allocation9 + $0x270] sm:$0xff]
    %v140 = vld [vmem:[#allocation9 + $0x278] sm:$0xff]
    %v141 = vld [vmem:[#allocation9 + $0x280] sm:$0xff]
    %v142 = vld [vmem:[#allocation9 + $0x288] sm:$0xff]
    %v143 = vld [vmem:[#allocation9 + $0x290] sm:$0xff]
    %v144 = vld [vmem:[#allocation9 + $0x298] sm:$0xff]
    %v145 = vld [vmem:[#allocation9 + $0x2a0] sm:$0xff]
    %v146 = vld [vmem:[#allocation9 + $0x2a8] sm:$0xff]
    %v147 = vld [vmem:[#allocation9 + $0x2b0] sm:$0xff]
    %v148 = vld [vmem:[#allocation9 + $0x2b8] sm:$0xff]
    %v149 = vld [vmem:[#allocation9 + $0x2c0] sm:$0xff]
    %v150 = vld [vmem:[#allocation9 + $0x2c8] sm:$0xff]
    %v151 = vld [vmem:[#allocation9 + $0x2d0] sm:$0xff]
    %v152 = vld [vmem:[#allocation9 + $0x2d8] sm:$0xff]
    %v153 = vld [vmem:[#allocation9 + $0x2e0] sm:$0xff]
    %v154 = vld [vmem:[#allocation9 + $0x2e8] sm:$0xff]
    %v155 = vld [vmem:[#allocation9 + $0x2f0] sm:$0xff]
    %v156 = vld [vmem:[#allocation9 + $0x2f8] sm:$0xff]
    %v157 = vld [vmem:[#allocation9 + $0x300] sm:$0xff]
    %v158 = vld [vmem:[#allocation9 + $0x308] sm:$0xff]
    %v159 = vld [vmem:[#allocation9 + $0x310] sm:$0xff]
    %v160 = vld [vmem:[#allocation9 + $0x318] sm:$0xff]
    %v161 = vld [vmem:[#allocation9 + $0x320] sm:$0xff]
    %v162 = vld [vmem:[#allocation9 + $0x328] sm:$0xff]
    %v163 = vld [vmem:[#allocation9 + $0x330] sm:$0xff]
    %v164 = vld [vmem:[#allocation9 + $0x338] sm:$0xff]
    %v165 = vld [vmem:[#allocation9 + $0x340] sm:$0xff]
    %v166 = vld [vmem:[#allocation9 + $0x348] sm:$0xff]
    %v167 = vld [vmem:[#allocation9 + $0x350] sm:$0xff]
    %v168 = vld [vmem:[#allocation9 + $0x358] sm:$0xff]
    %v169 = vld [vmem:[#allocation9 + $0x360] sm:$0xff]
    %v170 = vld [vmem:[#allocation9 + $0x368] sm:$0xff]
    %v171 = vld [vmem:[#allocation9 + $0x370] sm:$0xff]
    %v172 = vld [vmem:[#allocation9 + $0x378] sm:$0xff]
    %v173 = vld [vmem:[#allocation9 + $0x380] sm:$0xff]
    %v174 = vld [vmem:[#allocation9 + $0x388] sm:$0xff]
    %v175 = vld [vmem:[#allocation9 + $0x390] sm:$0xff]
    %v176 = vld [vmem:[#allocation9 + $0x398] sm:$0xff]
    %v177 = vld [vmem:[#allocation9 + $0x3a0] sm:$0xff]
    %v178 = vld [vmem:[#allocation9 + $0x3a8] sm:$0xff]
    %v179 = vld [vmem:[#allocation9 + $0x3b0] sm:$0xff]
    %v180 = vld [vmem:[#allocation9 + $0x3b8] sm:$0xff]
    %v181 = vld [vmem:[#allocation9 + $0x3c0] sm:$0xff]
    %v182 = vld [vmem:[#allocation9 + $0x3c8] sm:$0xff]
    %v183 = vld [vmem:[#allocation9 + $0x3d0] sm:$0xff]
    %v184 = vld [vmem:[#allocation9 + $0x3d8] sm:$0xff]
    %v185 = vld [vmem:[#allocation9 + $0x3e0] sm:$0xff]
    %v186 = vld [vmem:[#allocation9 + $0x3e8] sm:$0xff]
    %v187 = vld [vmem:[#allocation9 + $0x3f0] sm:$0xff]
    %v188 = vld [vmem:[#allocation9 + $0x3f8] sm:$0xff]
    %v189 = vld [vmem:[%s3] sm:$0xf]
    %v191 = vlaneseq
    %v192 = vshrl.u32 %v191, 7
    %v193 = vsub.s32 0, %v192
    %v194 = vrot.slane %v60, %v193
    %v195 = vlaneseq
    %v196 = vshrl.u32 %v195, 7
    %v197 = vsub.s32 1, %v196
    %v198 = vrot.slane %v60, %v197
    %v202 = vlaneseq
    %v203 = vshrl.u32 %v202, 7
    %v204 = vsub.s32 0, %v203
    %v205 = vrot.slane %v189, %v204
    %v206 = vlaneseq
    %v207 = vshrl.u32 %v206, 7
    %v208 = vsub.s32 1, %v207
    %v209 = vrot.slane %v189, %v208
    %v210 = vlaneseq
    %v211 = vshrl.u32 %v210, 7
    %v212 = vsub.s32 2, %v211
    %v213 = vrot.slane %v189, %v212
    %v214 = vlaneseq
    %v215 = vshrl.u32 %v214, 7
    %v216 = vsub.s32 3, %v215
    %v217 = vrot.slane %v189, %v216
    %222 = vmatprep.subr.mxu0 %v122
    %223 = vmatpush1.msra.mxu0 %v121
    %224 = vmatprep.subr.mxu0 %v118
    %225 = vmatpush1.msra.mxu0 %v117
    %226 = vmatprep.subr.mxu0 %v114
    %227 = vmatpush1.msra.mxu0 %v113
    %228 = vmatprep.subr.mxu0 %v110
    %229 = vmatpush1.msra.mxu0 %v109
    %230 = vmatprep.subr.mxu0 %v106
    %231 = vmatpush1.msra.mxu0 %v105
    %232 = vmatprep.subr.mxu0 %v102
    %233 = vmatpush1.msra.mxu0 %v101
    %234 = vmatprep.subr.mxu0 %v98
    %235 = vmatpush1.msra.mxu0 %v97
    %236 = vmatprep.subr.mxu0 %v94
    %237 = vmatpush1.msra.mxu0 %v93
    %238 = vmatprep.subr.mxu0 %v90
    %239 = vmatpush1.msra.mxu0 %v89
    %240 = vmatprep.subr.mxu0 %v86
    %241 = vmatpush1.msra.mxu0 %v85
    %242 = vmatprep.subr.mxu0 %v82
    %243 = vmatpush1.msra.mxu0 %v81
    %244 = vmatprep.subr.mxu0 %v78
    %245 = vmatpush1.msra.mxu0 %v77
    %246 = vmatprep.subr.mxu0 %v74
    %247 = vmatpush1.msra.mxu0 %v73
    %248 = vmatprep.subr.mxu0 %v70
    %249 = vmatpush1.msra.mxu0 %v69
    %250 = vmatprep.subr.mxu0 %v66
    %251 = vmatpush1.msra.mxu0 %v65
    %252 = vmatprep.subr.mxu0 %v62
    %253 = vmatpush1.msra.mxu0 %v61
    %254 = vmatprep.subr.mxu0 %v186
    %255 = vmatpush2.msra.mxu0 %v185
    %256 = vmatprep.subr.mxu0 %v182
    %257 = vmatpush2.msra.mxu0 %v181
    %258 = vmatprep.subr.mxu0 %v178
    %259 = vmatpush2.msra.mxu0 %v177
    %260 = vmatprep.subr.mxu0 %v174
    %261 = vmatpush2.msra.mxu0 %v173
    %262 = vmatprep.subr.mxu0 %v170
    %263 = vmatpush2.msra.mxu0 %v169
    %264 = vmatprep.subr.mxu0 %v166
    %265 = vmatpush2.msra.mxu0 %v165
    %266 = vmatprep.subr.mxu0 %v162
    %267 = vmatpush2.msra.mxu0 %v161
    %268 = vmatprep.subr.mxu0 %v158
    %269 = vmatpush2.msra.mxu0 %v157
    %270 = vmatprep.subr.mxu0 %v154
    %271 = vmatpush2.msra.mxu0 %v153
    %272 = vmatprep.subr.mxu0 %v150
    %273 = vmatpush2.msra.mxu0 %v149
    %274 = vmatprep.subr.mxu0 %v146
    %275 = vmatpush2.msra.mxu0 %v145
    %276 = vmatprep.subr.mxu0 %v142
    %277 = vmatpush2.msra.mxu0 %v141
    %278 = vmatprep.subr.mxu0 %v138
    %279 = vmatpush2.msra.mxu0 %v137
    %280 = vmatprep.subr.mxu0 %v134
    %281 = vmatpush2.msra.mxu0 %v133
    %282 = vmatprep.subr.mxu0 %v130
    %283 = vmatpush2.msra.mxu0 %v129
    %284 = vmatprep.subr.mxu0 %v126
    %285 = vmatpush2.msra.mxu0 %v125
    %286 = vmatprep.mubr.f32.mxu0 %v198
    %287 = vmatmul.mubr.f32.gmra.mxu0 %v194
    %v288 = vpop.f32.mrf.mxu0
    %v289 = vadd.f32 %v205, %v288
    %v290 = vpop.f32.mrf.mxu0
    %v291 = vadd.f32 %v209, %v290
    %292 = vdwg.mxu0
    %293 = vmatprep.subr.mxu0 %v124
    %294 = vmatpush1.msra.mxu0 %v123
    %295 = vmatprep.subr.mxu0 %v120
    %296 = vmatpush1.msra.mxu0 %v119
    %297 = vmatprep.subr.mxu0 %v116
    %298 = vmatpush1.msra.mxu0 %v115
    %299 = vmatprep.subr.mxu0 %v112
    %300 = vmatpush1.msra.mxu0 %v111
    %301 = vmatprep.subr.mxu0 %v108
    %302 = vmatpush1.msra.mxu0 %v107
    %303 = vmatprep.subr.mxu0 %v104
    %304 = vmatpush1.msra.mxu0 %v103
    %305 = vmatprep.subr.mxu0 %v100
    %306 = vmatpush1.msra.mxu0 %v99
    %307 = vmatprep.subr.mxu0 %v96
    %308 = vmatpush1.msra.mxu0 %v95
    %309 = vmatprep.subr.mxu0 %v92
    %310 = vmatpush1.msra.mxu0 %v91
    %311 = vmatprep.subr.mxu0 %v88
    %312 = vmatpush1.msra.mxu0 %v87
    %313 = vmatprep.subr.mxu0 %v84
    %314 = vmatpush1.msra.mxu0 %v83
    %315 = vmatprep.subr.mxu0 %v80
    %316 = vmatpush1.msra.mxu0 %v79
    %317 = vmatprep.subr.mxu0 %v76
    %318 = vmatpush1.msra.mxu0 %v75
    %319 = vmatprep.subr.mxu0 %v72
    %320 = vmatpush1.msra.mxu0 %v71
    %321 = vmatprep.subr.mxu0 %v68
    %322 = vmatpush1.msra.mxu0 %v67
    %323 = vmatprep.subr.mxu0 %v64
    %324 = vmatpush1.msra.mxu0 %v63
    %325 = vmatprep.subr.mxu0 %v188
    %326 = vmatpush2.msra.mxu0 %v187
    %327 = vmatprep.subr.mxu0 %v184
    %328 = vmatpush2.msra.mxu0 %v183
    %329 = vmatprep.subr.mxu0 %v180
    %330 = vmatpush2.msra.mxu0 %v179
    %331 = vmatprep.subr.mxu0 %v176
    %332 = vmatpush2.msra.mxu0 %v175
    %333 = vmatprep.subr.mxu0 %v172
    %334 = vmatpush2.msra.mxu0 %v171
    %335 = vmatprep.subr.mxu0 %v168
    %336 = vmatpush2.msra.mxu0 %v167
    %337 = vmatprep.subr.mxu0 %v164
    %338 = vmatpush2.msra.mxu0 %v163
    %339 = vmatprep.subr.mxu0 %v160
    %340 = vmatpush2.msra.mxu0 %v159
    %341 = vmatprep.subr.mxu0 %v156
    %342 = vmatpush2.msra.mxu0 %v155
    %343 = vmatprep.subr.mxu0 %v152
    %344 = vmatpush2.msra.mxu0 %v151
    %345 = vmatprep.subr.mxu0 %v148
    %346 = vmatpush2.msra.mxu0 %v147
    %347 = vmatprep.subr.mxu0 %v144
    %348 = vmatpush2.msra.mxu0 %v143
    %349 = vmatprep.subr.mxu0 %v140
    %350 = vmatpush2.msra.mxu0 %v139
    %351 = vmatprep.subr.mxu0 %v136
    %352 = vmatpush2.msra.mxu0 %v135
    %353 = vmatprep.subr.mxu0 %v132
    %354 = vmatpush2.msra.mxu0 %v131
    %355 = vmatprep.subr.mxu0 %v128
    %356 = vmatpush2.msra.mxu0 %v127
    %357 = vmatprep.mubr.f32.mxu0 %v198
    %358 = vmatmul.mubr.f32.gmra.mxu0 %v194
    %v359 = vpop.f32.mrf.mxu0
    %v360 = vadd.f32 %v213, %v359
    %v361 = vpop.f32.mrf.mxu0
    %v362 = vadd.f32 %v217, %v361
    %363 = vdwg.mxu0
    %v364 = vxor.u32 %v289, 2147483648
    %v365 = vxor.u32 %v291, 2147483648
    %v366 = vmul.f32 %v364, 1.442695
    %v367 = vpow.pop %v366
    %v368 = vmul.f32 %v365, 1.442695
    %v369 = vpow.pop %v368
    %v370 = vadd.f32 %v367, 1.0
    %v371 = vadd.f32 %v369, 1.0
    %v372 = vrcp.pop %v370
    %v373 = vmul.f32 1.0, %v372
    %v374 = vrcp.pop %v371
    %v375 = vmul.f32 1.0, %v374
    %v376 = vmul.f32 %v373, %v362
    %v377 = vadd.f32 %v360, %v376
    %v378 = vtanh.pop %v377
    %v379 = vsub.f32 1.0, %v375
    %v380 = vmul.f32 %v379, %v378
    %v381 = vmul.f32 %v375, %v53
    %v382 = vadd.f32 %v380, %v381
    %383 = vst [vmem:[#allocation2] sm:$0x1] %v382
    %384 = vst [vmem:[#allocation11] sm:$0x1] %v382
    // Predicated region
    $region26: #{tpu_custom_call.1} parent=1 // pred_check
      _
    $region27: #{tpu_custom_call.1} parent=1 // pred_check_branch
      %386 = sbr.rel (0) target = $region29
    $region28: #{tpu_custom_call.1} parent=1 // pred_region
      %s388 = ssub.s32 128, 128
      %389 = vsyncadd [#allocation8], %s388
      %s391 = sshll.u32 [#allocation11], 4
      %s392 = int_to_ptr.vmem [resolvable:$true] %s391
      %394 = dma.vmem_to_hbm [thread:$0]  %s392, 128, %s5, [#allocation8]
    $region29: #{tpu_custom_call.1} parent=1 // pred_fallthru
      _
    // Predicated region
    $region30: #{tpu_custom_call.1} parent=1 // pred_check
      _
    $region31: #{tpu_custom_call.1} parent=1 // pred_check_branch
      %396 = sbr.rel (0) target = $region33
    $region32: #{tpu_custom_call.1} parent=1 // pred_region
      %397 = dma.done [#allocation8], 128
    $region33: #{tpu_custom_call.1} parent=1 // pred_fallthru
      _
    %398 = vsyncpa [#allocation7], 1
    %399 = vsyncpa [#allocation10], 1
    %400 = vsyncpa [#allocation8], 1

</llo_original>
